<compile_context>
chip_gen: v6e
topology: v6e:2x2x1
jax: 0.10.0
libtpu: 0.0.40
codegen_flags: <defaults>
</compile_context>

<pallas_src>
import functools

import jax
import jax.numpy as jnp
from jax.experimental import pallas as pl
from jax.experimental.pallas import tpu as pltpu

TEMP = 0.07
BN_EPS = 1e-5
NORM_EPS = 1e-12
FEAT = 64
FEAT_PAD = 128
HIDDEN = 512
# Explicit scoped-VMEM limit: above v5e's 16 MiB default, below v7x's 64 MiB physical.
VMEM_LIMIT_BYTES = 48 * 1024 * 1024


def stats_kernel(x_ref, w1_ref, h_ref, stats_ref):
    """Pass 1: h = x @ w1 (bf16 weights, f32 acc) + per-tile partial BN statistics.

    Every grid step writes its own h tile and its own (8, 512) stats block
    [sum; sum_sq; zeros x 6], so the batch axis is fully parallel (v7x megacore).
    """
    h = jnp.dot(x_ref[...].astype(jnp.bfloat16), w1_ref[...],
                preferred_element_type=jnp.float32)

    # Partial whole-batch statistics from the f32 h (single read of h, fused XLU work).
    s = jnp.sum(h, axis=0, keepdims=True)        # (1, 512)
    sq = jnp.sum(h * h, axis=0, keepdims=True)   # (1, 512)
    stats_ref[...] = jnp.concatenate(
        [s, sq, jnp.zeros((6, HIDDEN), jnp.float32)], axis=0)

    # Store the intermediate activation in bf16: h is written here and re-read in
    # pass 2, so this halves the dominant HBM stream.
    h_ref[...] = h.astype(jnp.bfloat16)


def head_kernel(h_ref, sum_ref, sq_ref, gamma_ref, beta_ref,
                w2_ref, b2_ref, wfc_ref, bfc_ref,
                feat_ref, prob_ref, *, inv_n):
    """Pass 2: BN(affine-folded) -> ReLU -> Linear(512,64) -> fc -> normalize, softmax/temp."""
    # Fold BatchNorm1d (training-mode batch stats, biased variance) into one affine.
    mean = sum_ref[...] * inv_n
    var = jnp.maximum(sq_ref[...] * inv_n - mean * mean, 0.0)
    scale = gamma_ref[...] * jax.lax.rsqrt(var + BN_EPS)        # (1, 512)
    shift = beta_ref[...] - mean * scale                        # (1, 512)

    # BN + ReLU in f32 (v5e has no bf16 VPU); h arrives bf16 from pass 1.
    a = jnp.maximum(h_ref[...].astype(jnp.float32) * scale + shift, 0.0)

    # g[3]: Linear(512, 64) (feature dim padded to 128 lanes with zero cols).
    feat = jnp.dot(a.astype(jnp.bfloat16), w2_ref[...],
                   preferred_element_type=jnp.float32) + b2_ref[...]

    # fc: Linear(64, num_class), bf16 operands / f32 accumulation.
    # Class dim padded to a 128 multiple; padded bias = -1e30 so softmax ignores it.
    logits = jnp.dot(feat.astype(jnp.bfloat16), wfc_ref[...],
                     preferred_element_type=jnp.float32) + bfc_ref[...]

    # F.normalize(feature, dim=-1).  Padded feat columns are exactly 0 so the norm is
    # identical to the 64-dim norm.  rsqrt goes to the EUP slot.
    sumsq = jnp.sum(feat * feat, axis=-1, keepdims=True)
    feat_ref[...] = feat * jax.lax.rsqrt(jnp.maximum(sumsq, NORM_EPS * NORM_EPS))

    # softmax(dim=1) / temp, 1/temp folded into the (approx, EUP) reciprocal.
    # Padded logits are -1e30 -> exp underflows to 0 and does not touch the denominator.
    m = jnp.max(logits, axis=-1, keepdims=True)
    e = jnp.exp(logits - m)
    denom = jnp.sum(e, axis=-1, keepdims=True)
    prob_ref[...] = e * pl.reciprocal(denom * TEMP, approx=True)


def _pick_batch_tile(B):
    # Bigger tiles get closer to the HBM roofline (per-grid-step overhead ~0.35 us);
    # tiles that are multiples of 16 keep the bf16 h block on native sublane tiling.
    if B % 16 == 0:
        for tb in (2048, 1024, 512, 256, 128, 64, 32, 16):
            if B % tb == 0:
                return tb
    return B  # fallback: whole batch in one tile (block == full array dims)


def supnet_forward(x, params):
    """x: (B, 512) flattened backbone feature (f32, or bf16 if the backbone emits bf16).

    Returns (F.normalize(feature, dim=-1) -> (B, 64), softmax(out, dim=1)/temp -> (B, C)).
    """
    B = x.shape[0]
    assert B % 8 == 0, "batch must be a multiple of 8 (f32 sublane tile)"
    w1, gamma, beta, w2, b2, wfc, bfc = params
    num_class = wfc.shape[1]

    TB = _pick_batch_tile(B)
    nB = B // TB
    CPAD = ((num_class + 127) // 128) * 128

    # bf16 weight storage for all matmuls (f32 accumulation on the MXU).
    w1_bf = w1.astype(jnp.bfloat16)                                          # (512, 512)
    w2_p = jnp.pad(w2, ((0, 0), (0, FEAT_PAD - FEAT))).astype(jnp.bfloat16)  # (512, 128)
    b2_p = jnp.pad(b2, (0, FEAT_PAD - FEAT)).reshape(1, FEAT_PAD)
    wfc_p = jnp.pad(wfc, ((0, FEAT_PAD - FEAT),
                          (0, CPAD - num_class))).astype(jnp.bfloat16)       # (128, CPAD)
    bfc_p = jnp.pad(bfc, (0, CPAD - num_class),
                    constant_values=-1e30).reshape(1, CPAD)
    gamma_r = gamma.reshape(1, HIDDEN)
    beta_r = beta.reshape(1, HIDDEN)

    # --- Pass 1: h = x @ w1 (bf16 out) + per-tile partial BN stats, fully parallel. ---
    h, stats = pl.pallas_call(
        stats_kernel,
        grid=(nB,),
        in_specs=[
            pl.BlockSpec((TB, HIDDEN), lambda i: (i, 0)),
            pl.BlockSpec((HIDDEN, HIDDEN), lambda i: (0, 0)),
        ],
        out_specs=(
            pl.BlockSpec((TB, HIDDEN), lambda i: (i, 0)),
            pl.BlockSpec((8, HIDDEN), lambda i: (i, 0)),
        ),
        out_shape=(
            jax.ShapeDtypeStruct((B, HIDDEN), jnp.bfloat16),
            jax.ShapeDtypeStruct((8 * nB, HIDDEN), jnp.float32),
        ),
        compiler_params=pltpu.CompilerParams(
            dimension_semantics=("parallel",),
            vmem_limit_bytes=VMEM_LIMIT_BYTES),
    )(x, w1_bf)

    # Tiny cross-tile reduction of the partial stats (nB x 2 x 512 f32) in the wrapper.
    stats = stats.reshape(nB, 8, HIDDEN)
    hsum = jnp.sum(stats[:, 0, :], axis=0, keepdims=True)   # (1, 512)
    hsq = jnp.sum(stats[:, 1, :], axis=0, keepdims=True)    # (1, 512)

    # --- Pass 2: BN(affine) -> ReLU -> Linear -> fc -> normalize / softmax, per tile. ---
    kern2 = functools.partial(head_kernel, inv_n=1.0 / B)
    feat_p, probs_p = pl.pallas_call(
        kern2,
        grid=(nB,),
        in_specs=[
            pl.BlockSpec((TB, HIDDEN), lambda i: (i, 0)),
            pl.BlockSpec((1, HIDDEN), lambda i: (0, 0)),
            pl.BlockSpec((1, HIDDEN), lambda i: (0, 0)),
            pl.BlockSpec((1, HIDDEN), lambda i: (0, 0)),
            pl.BlockSpec((1, HIDDEN), lambda i: (0, 0)),
            pl.BlockSpec((HIDDEN, FEAT_PAD), lambda i: (0, 0)),
            pl.BlockSpec((1, FEAT_PAD), lambda i: (0, 0)),
            pl.BlockSpec((FEAT_PAD, CPAD), lambda i: (0, 0)),
            pl.BlockSpec((1, CPAD), lambda i: (0, 0)),
        ],
        out_specs=(
            pl.BlockSpec((TB, FEAT_PAD), lambda i: (i, 0)),
            pl.BlockSpec((TB, CPAD), lambda i: (i, 0)),
        ),
        out_shape=(
            jax.ShapeDtypeStruct((B, FEAT_PAD), jnp.float32),
            jax.ShapeDtypeStruct((B, CPAD), jnp.float32),
        ),
        compiler_params=pltpu.CompilerParams(
            dimension_semantics=("parallel",),
            vmem_limit_bytes=VMEM_LIMIT_BYTES),
    )(h, hsum, hsq, gamma_r, beta_r, w2_p, b2_p, wfc_p, bfc_p)

    # Strip lane padding in the wrapper (outputs inside the kernel stay lane-dense).
    return feat_p[:, :FEAT], probs_p[:, :num_class]


def supnet_reference(x, params):
    """Pure-JAX f32 reference (training-mode BatchNorm, like the kernel)."""
    w1, gamma, beta, w2, b2, wfc, bfc = params
    h = x @ w1
    mean = jnp.mean(h, axis=0, keepdims=True)
    var = jnp.mean(h * h, axis=0, keepdims=True) - mean * mean
    a = jnp.maximum((h - mean) * jax.lax.rsqrt(var + BN_EPS) * gamma + beta, 0.0)
    feat = a @ w2 + b2
    logits = feat @ wfc + bfc
    norm = jnp.maximum(jnp.linalg.norm(feat, axis=-1, keepdims=True), NORM_EPS)
    return feat / norm, jax.nn.softmax(logits, axis=1) / TEMP


def init_params(key, num_class):
    ks = jax.random.split(key, 6)
    # PyTorch Linear stores weight as (out, in); we pre-transpose to (in, out).
    w1 = jax.random.normal(ks[0], (512, 512), jnp.float32) * 0.02          # g[0] weight^T
    gamma = jnp.ones((512,), jnp.float32)                                   # BN weight
    beta = jnp.zeros((512,), jnp.float32)                                   # BN bias
    w2 = jax.random.normal(ks[1], (512, 64), jnp.float32) * 0.02            # g[3] weight^T
    b2 = jax.random.normal(ks[2], (64,), jnp.float32) * 0.02                # g[3] bias
    wfc = jax.random.normal(ks[3], (64, num_class), jnp.float32) * 0.02     # fc weight^T
    bfc = jax.random.normal(ks[4], (num_class,), jnp.float32) * 0.02        # fc bias
    return (w1, gamma, beta, w2, b2, wfc, bfc)


if __name__ == "__main__":
    key = jax.random.PRNGKey(0)
    k_x, k_p = jax.random.split(key)

    B = 8
    NUM_CLASS = 10
    # Input = flattened backbone feature (see TODO(synk) above).
    x = jax.random.normal(k_x, (B, 512), jnp.float32)
    params = init_params(k_p, NUM_CLASS)

    feat_norm, probs = supnet_forward(x, params)
    jax.block_until_ready((feat_norm, probs))

    ref_feat, ref_probs = supnet_reference(x, params)

    assert feat_norm.shape == (B, 64)
    assert probs.shape == (B, NUM_CLASS)
    assert bool(jnp.all(jnp.isfinite(feat_norm)))
    assert bool(jnp.all(jnp.isfinite(probs)))
    # bf16 weights/activations + approx reciprocal -> loose tolerances vs f32 reference.
    assert bool(jnp.allclose(feat_norm, ref_feat, atol=5e-2)), "feature mismatch vs reference"
    assert bool(jnp.allclose(probs, ref_probs, atol=5e-2)), "probs mismatch vs reference"
    # softmax/temp rows should sum to ~1/temp; unit-norm features.
    assert bool(jnp.all(jnp.abs(jnp.sum(probs, axis=1) - 1.0 / TEMP) < 0.5))
    assert bool(jnp.all(jnp.abs(jnp.sum(feat_norm * feat_norm, axis=1) - 1.0) < 1e-2))
    print("KERNEL_OK")
</pallas_src>

<mosaic_0001>
module attributes {stable_mosaic.version = 11 : i64} {
  func.func @stats_kernel(%arg0: i32, %arg1: memref<8x512xf32, #tpu.memory_space<vmem>>, %arg2: memref<512x512xbf16, #tpu.memory_space<vmem>>, %arg3: memref<8x512xbf16, #tpu.memory_space<vmem>>, %arg4: memref<8x512xf32, #tpu.memory_space<vmem>>) attributes {dimension_semantics = [#tpu.dimension_semantics<parallel>], iteration_bounds = array<i64: 1>, scalar_prefetch = 0 : i64, scratch_operands = 0 : i64, tpu.core_type = #tpu.core_type<tc>, window_params = [{transform_indices = @transform_0, window_bounds = array<i64: 8, 512>}, {pipeline_mode = #tpu.pipeline_mode<synchronous>, transform_indices = @transform_1, window_bounds = array<i64: 512, 512>}, {transform_indices = @transform_2, window_bounds = array<i64: 8, 512>}, {transform_indices = @transform_3, window_bounds = array<i64: 8, 512>}]} {
    %c0 = arith.constant 0 : index
    %c0_0 = arith.constant 0 : index
    %0 = vector.load %arg1[%c0, %c0_0] : memref<8x512xf32, #tpu.memory_space<vmem>>, vector<8x512xf32>
    %1 = arith.truncf %0 : vector<8x512xf32> to vector<8x512xbf16>
    %c0_1 = arith.constant 0 : index
    %c0_2 = arith.constant 0 : index
    %2 = vector.load %arg2[%c0_1, %c0_2] : memref<512x512xbf16, #tpu.memory_space<vmem>>, vector<512x512xbf16>
    %cst = arith.constant dense<0.000000e+00> : vector<8x512xf32>
    %3 = tpu.matmul %1, %2, %cst {dimension_numbers = #tpu.dot_dimension_numbers<[1], [0], [0], [1], [0, 0, 1, 1], [], []>} : vector<8x512xbf16>, vector<512x512xbf16>, vector<8x512xf32> -> vector<8x512xf32>
    %cst_3 = arith.constant dense<0.000000e+00> : vector<512xf32>
    %4 = vector.multi_reduction <add>, %3, %cst_3 [0] : vector<8x512xf32> to vector<512xf32>
    %5 = vector.shape_cast %4 : vector<512xf32> to vector<1x512xf32>
    %6 = arith.mulf %3, %3 : vector<8x512xf32>
    %cst_4 = arith.constant dense<0.000000e+00> : vector<512xf32>
    %7 = vector.multi_reduction <add>, %6, %cst_4 [0] : vector<8x512xf32> to vector<512xf32>
    %8 = vector.shape_cast %7 : vector<512xf32> to vector<1x512xf32>
    %cst_5 = arith.constant 0.000000e+00 : f32
    %9 = vector.broadcast %cst_5 : f32 to vector<6x512xf32>
    %10 = tpu.concatenate %5, %8, %9 in 0 : vector<1x512xf32>, vector<1x512xf32>, vector<6x512xf32> -> vector<8x512xf32>
    %c0_6 = arith.constant 0 : index
    %c0_7 = arith.constant 0 : index
    %11 = vector.load %arg4[%c0_6, %c0_7] : memref<8x512xf32, #tpu.memory_space<vmem>>, vector<8x512xf32>
    tpu.vector_store %arg4[%c0_6, %c0_7], %10 {strides = array<i32>} : memref<8x512xf32, #tpu.memory_space<vmem>>, vector<8x512xf32>,
    %12 = arith.truncf %3 : vector<8x512xf32> to vector<8x512xbf16>
    %c0_8 = arith.constant 0 : index
    %c0_9 = arith.constant 0 : index
    %13 = vector.load %arg3[%c0_8, %c0_9] : memref<8x512xbf16, #tpu.memory_space<vmem>>, vector<8x512xbf16>
    tpu.vector_store %arg3[%c0_8, %c0_9], %12 {strides = array<i32>} : memref<8x512xbf16, #tpu.memory_space<vmem>>, vector<8x512xbf16>,
    return
  }
  func.func @transform_0(%arg0: i32) -> (i32, i32) {
    %c0_i32 = arith.constant 0 : i32
    %c0_i32_0 = arith.constant 0 : i32
    return %arg0, %c0_i32 : i32, i32
  }
  func.func @transform_1(%arg0: i32) -> (i32, i32) {
    %c0_i32 = arith.constant 0 : i32
    %c0_i32_0 = arith.constant 0 : i32
    %c0_i32_1 = arith.constant 0 : i32
    return %c0_i32, %c0_i32_0 : i32, i32
  }
  func.func @transform_2(%arg0: i32) -> (i32, i32) {
    %c0_i32 = arith.constant 0 : i32
    %c0_i32_0 = arith.constant 0 : i32
    return %arg0, %c0_i32 : i32, i32
  }
  func.func @transform_3(%arg0: i32) -> (i32, i32) {
    %c0_i32 = arith.constant 0 : i32
    %c0_i32_0 = arith.constant 0 : i32
    return %arg0, %c0_i32 : i32, i32
  }
}

</mosaic_0001>

<llo_original>
// kernel: tpu_custom_call.1
$region0: #{tpu_custom_call.1}
  #allocation0 [shape = 'u32[]', space=smem, size = 0x4, offset = 0x4, fixed_abs, tag = 'smem constant byte address 0x4 - core index']
  #allocation1 [shape = 'u32[144,128]{1,0:T(1,128)}', space=vmem, size = 0x12000, scoped, tag = 'internal scratch']
  %s0 = inlined_call_operand.hbm [shape: f32[8,512], index: 0, kind: input, shape index: {}]
  %s1 = inlined_call_operand.hbm [shape: bf16[512,512], index: 1, kind: input, shape index: {}]
  %s2 = inlined_call_operand.hbm [shape: bf16[8,512], index: 2, kind: output, shape index: {0}]
  %s3 = inlined_call_operand.hbm [shape: f32[8,512], index: 3, kind: output, shape index: {1}]
  %4 = xla_tuple %s2, %s3
  %s5 = sld [smem:[#allocation0]]
  $region34: #{tpu_custom_call.1} parent=0
    _
  %s7 = ssub.s32 1, %s5
  %s8 = scalar_select 0, %s7, %s5
  $region1: #{tpu_custom_call.1} parent=0
    #allocation2 [shape = 'u8[16384]{0}', space=vmem, size = 0x4000, scoped, tag = 'input window, operand 0, single buffered']
    #allocation3 [shape = 's32[1]{0}', space=sflag, size = 0x4, scoped, tag = 'scoped memory for tpu_custom_call.1']
    #allocation4 [shape = 's32[1]{0}', space=sflag, size = 0x4, scoped, tag = 'scoped memory for tpu_custom_call.1']
    #allocation5 [shape = 'u8[524288]{0}', space=vmem, size = 0x80000, scoped, tag = 'input window, operand 1, single buffered']
    #allocation6 [shape = 's32[1]{0}', space=sflag, size = 0x4, scoped, tag = 'scoped memory for tpu_custom_call.1']
    #allocation7 [shape = 'u8[8192]{0}', space=vmem, size = 0x2000, scoped, tag = 'output window, operand 0, single buffered']
    #allocation8 [shape = 'u8[16384]{0}', space=vmem, size = 0x4000, scoped, tag = 'output window, operand 1, single buffered']
    #allocation9 [shape = 's32[1]{0}', space=sflag, size = 0x4, scoped, tag = 'scoped memory for tpu_custom_call.1']
    %9 = vsyncpa [#allocation3], 0
    %10 = vsyncpa [#allocation6], 0
    %11 = vsyncpa [#allocation4], 0
    %12 = vsyncpa [#allocation9], 0
    // Predicated region
    $region2: #{tpu_custom_call.1} parent=1 // pred_check
      _
    $region3: #{tpu_custom_call.1} parent=1 // pred_check_branch
      %14 = sbr.rel (0) target = $region5
    $region4: #{tpu_custom_call.1} parent=1 // pred_region
      %s16 = ssub.s32 512, 512
      %17 = vsyncadd [#allocation3], %s16
      %s19 = sshll.u32 [#allocation2], 4
      %s20 = int_to_ptr.vmem [resolvable:$true] %s19
      %22 = dma.hbm_to_vmem [thread:$0]  %s0, 512, %s20, [#allocation3]
    $region5: #{tpu_custom_call.1} parent=1 // pred_fallthru
      _
    // Predicated region
    $region6: #{tpu_custom_call.1} parent=1 // pred_check
      _
    $region7: #{tpu_custom_call.1} parent=1 // pred_check_branch
      %24 = sbr.rel (0) target = $region9
    $region8: #{tpu_custom_call.1} parent=1 // pred_region
      %s26 = ssub.s32 16384, 16384
      %27 = vsyncadd [#allocation6], %s26
      %s28 = sshll.u32 [#allocation5], 4
      %s29 = int_to_ptr.vmem [resolvable:$true] %s28
      %34 = dma.hbm_to_vmem [thread:$0]  %s1, 16384, %s29, [#allocation6], 256, 256, 16
    $region9: #{tpu_custom_call.1} parent=1 // pred_fallthru
      _
    // Predicated region
    $region10: #{tpu_custom_call.1} parent=1 // pred_check
      _
    $region11: #{tpu_custom_call.1} parent=1 // pred_check_branch
      %36 = sbr.rel (0) target = $region13
    $region12: #{tpu_custom_call.1} parent=1 // pred_region
      %37 = dma.done [#allocation3], 512
    $region13: #{tpu_custom_call.1} parent=1 // pred_fallthru
      _
    // Predicated region
    $region14: #{tpu_custom_call.1} parent=1 // pred_check
      _
    $region15: #{tpu_custom_call.1} parent=1 // pred_check_branch
      %39 = sbr.rel (0) target = $region17
    $region16: #{tpu_custom_call.1} parent=1 // pred_region
      %40 = dma.done [#allocation6], 16384
    $region17: #{tpu_custom_call.1} parent=1 // pred_fallthru
      _
    %v41 = vld [vmem:[#allocation2] sm:$0xff]
    %v42 = vld [vmem:[#allocation2 + $0x8] sm:$0xff]
    %v43 = vld [vmem:[#allocation2 + $0x10] sm:$0xff]
    %v44 = vld [vmem:[#allocation2 + $0x18] sm:$0xff]
    %v45 = vpack.c.bf16 %v41, %v41
    %v46 = vpack.c.bf16 %v42, %v42
    %v47 = vpack.c.bf16 %v43, %v43
    %v48 = vpack.c.bf16 %v44, %v44
    %v49 = vld [vmem:[#allocation5] sm:$0xff]
    %v50 = vld [vmem:[#allocation5 + $0x8] sm:$0xff]
    %v51 = vld [vmem:[#allocation5 + $0x10] sm:$0xff]
    %v52 = vld [vmem:[#allocation5 + $0x18] sm:$0xff]
    %v53 = vld [vmem:[#allocation5 + $0x20] sm:$0xff]
    %v54 = vld [vmem:[#allocation5 + $0x28] sm:$0xff]
    %v55 = vld [vmem:[#allocation5 + $0x30] sm:$0xff]
    %v56 = vld [vmem:[#allocation5 + $0x38] sm:$0xff]
    %v57 = vld [vmem:[#allocation5 + $0x40] sm:$0xff]
    %v58 = vld [vmem:[#allocation5 + $0x48] sm:$0xff]
    %v59 = vld [vmem:[#allocation5 + $0x50] sm:$0xff]
    %v60 = vld [vmem:[#allocation5 + $0x58] sm:$0xff]
    %v61 = vld [vmem:[#allocation5 + $0x60] sm:$0xff]
    %v62 = vld [vmem:[#allocation5 + $0x68] sm:$0xff]
    %v63 = vld [vmem:[#allocation5 + $0x70] sm:$0xff]
    %v64 = vld [vmem:[#allocation5 + $0x78] sm:$0xff]
    %v65 = vld [vmem:[#allocation5 + $0x80] sm:$0xff]
    %v66 = vld [vmem:[#allocation5 + $0x88] sm:$0xff]
    %v67 = vld [vmem:[#allocation5 + $0x90] sm:$0xff]
    %v68 = vld [vmem:[#allocation5 + $0x98] sm:$0xff]
    %v69 = vld [vmem:[#allocation5 + $0xa0] sm:$0xff]
    %v70 = vld [vmem:[#allocation5 + $0xa8] sm:$0xff]
    %v71 = vld [vmem:[#allocation5 + $0xb0] sm:$0xff]
    %v72 = vld [vmem:[#allocation5 + $0xb8] sm:$0xff]
    %v73 = vld [vmem:[#allocation5 + $0xc0] sm:$0xff]
    %v74 = vld [vmem:[#allocation5 + $0xc8] sm:$0xff]
    %v75 = vld [vmem:[#allocation5 + $0xd0] sm:$0xff]
    %v76 = vld [vmem:[#allocation5 + $0xd8] sm:$0xff]
    %v77 = vld [vmem:[#allocation5 + $0xe0] sm:$0xff]
    %v78 = vld [vmem:[#allocation5 + $0xe8] sm:$0xff]
    %v79 = vld [vmem:[#allocation5 + $0xf0] sm:$0xff]
    %v80 = vld [vmem:[#allocation5 + $0xf8] sm:$0xff]
    %v81 = vld [vmem:[#allocation5 + $0x100] sm:$0xff]
    %v82 = vld [vmem:[#allocation5 + $0x108] sm:$0xff]
    %v83 = vld [vmem:[#allocation5 + $0x110] sm:$0xff]
    %v84 = vld [vmem:[#allocation5 + $0x118] sm:$0xff]
    %v85 = vld [vmem:[#allocation5 + $0x120] sm:$0xff]
    %v86 = vld [vmem:[#allocation5 + $0x128] sm:$0xff]
    %v87 = vld [vmem:[#allocation5 + $0x130] sm:$0xff]
    %v88 = vld [vmem:[#allocation5 + $0x138] sm:$0xff]
    %v89 = vld [vmem:[#allocation5 + $0x140] sm:$0xff]
    %v90 = vld [vmem:[#allocation5 + $0x148] sm:$0xff]
    %v91 = vld [vmem:[#allocation5 + $0x150] sm:$0xff]
    %v92 = vld [vmem:[#allocation5 + $0x158] sm:$0xff]
    %v93 = vld [vmem:[#allocation5 + $0x160] sm:$0xff]
    %v94 = vld [vmem:[#allocation5 + $0x168] sm:$0xff]
    %v95 = vld [vmem:[#allocation5 + $0x170] sm:$0xff]
    %v96 = vld [vmem:[#allocation5 + $0x178] sm:$0xff]
    %v97 = vld [vmem:[#allocation5 + $0x180] sm:$0xff]
    %v98 = vld [vmem:[#allocation5 + $0x188] sm:$0xff]
    %v99 = vld [vmem:[#allocation5 + $0x190] sm:$0xff]
    %v100 = vld [vmem:[#allocation5 + $0x198] sm:$0xff]
    %v101 = vld [vmem:[#allocation5 + $0x1a0] sm:$0xff]
    %v102 = vld [vmem:[#allocation5 + $0x1a8] sm:$0xff]
    %v103 = vld [vmem:[#allocation5 + $0x1b0] sm:$0xff]
    %v104 = vld [vmem:[#allocation5 + $0x1b8] sm:$0xff]
    %v105 = vld [vmem:[#allocation5 + $0x1c0] sm:$0xff]
    %v106 = vld [vmem:[#allocation5 + $0x1c8] sm:$0xff]
    %v107 = vld [vmem:[#allocation5 + $0x1d0] sm:$0xff]
    %v108 = vld [vmem:[#allocation5 + $0x1d8] sm:$0xff]
    %v109 = vld [vmem:[#allocation5 + $0x1e0] sm:$0xff]
    %v110 = vld [vmem:[#allocation5 + $0x1e8] sm:$0xff]
    %v111 = vld [vmem:[#allocation5 + $0x1f0] sm:$0xff]
    %v112 = vld [vmem:[#allocation5 + $0x1f8] sm:$0xff]
    %v113 = vld [vmem:[#allocation5 + $0x200] sm:$0xff]
    %v114 = vld [vmem:[#allocation5 + $0x208] sm:$0xff]
    %v115 = vld [vmem:[#allocation5 + $0x210] sm:$0xff]
    %v116 = vld [vmem:[#allocation5 + $0x218] sm:$0xff]
    %v117 = vld [vmem:[#allocation5 + $0x220] sm:$0xff]
    %v118 = vld [vmem:[#allocation5 + $0x228] sm:$0xff]
    %v119 = vld [vmem:[#allocation5 + $0x230] sm:$0xff]
    %v120 = vld [vmem:[#allocation5 + $0x238] sm:$0xff]
    %v121 = vld [vmem:[#allocation5 + $0x240] sm:$0xff]
    %v122 = vld [vmem:[#allocation5 + $0x248] sm:$0xff]
    %v123 = vld [vmem:[#allocation5 + $0x250] sm:$0xff]
    %v124 = vld [vmem:[#allocation5 + $0x258] sm:$0xff]
    %v125 = vld [vmem:[#allocation5 + $0x260] sm:$0xff]
    %v126 = vld [vmem:[#allocation5 + $0x268] sm:$0xff]
    %v127 = vld [vmem:[#allocation5 + $0x270] sm:$0xff]
    %v128 = vld [vmem:[#allocation5 + $0x278] sm:$0xff]
    %v129 = vld [vmem:[#allocation5 + $0x280] sm:$0xff]
    %v130 = vld [vmem:[#allocation5 + $0x288] sm:$0xff]
    %v131 = vld [vmem:[#allocation5 + $0x290] sm:$0xff]
    %v132 = vld [vmem:[#allocation5 + $0x298] sm:$0xff]
    %v133 = vld [vmem:[#allocation5 + $0x2a0] sm:$0xff]
    %v134 = vld [vmem:[#allocation5 + $0x2a8] sm:$0xff]
    %v135 = vld [vmem:[#allocation5 + $0x2b0] sm:$0xff]
    %v136 = vld [vmem:[#allocation5 + $0x2b8] sm:$0xff]
    %v137 = vld [vmem:[#allocation5 + $0x2c0] sm:$0xff]
    %v138 = vld [vmem:[#allocation5 + $0x2c8] sm:$0xff]
    %v139 = vld [vmem:[#allocation5 + $0x2d0] sm:$0xff]
    %v140 = vld [vmem:[#allocation5 + $0x2d8] sm:$0xff]
    %v141 = vld [vmem:[#allocation5 + $0x2e0] sm:$0xff]
    %v142 = vld [vmem:[#allocation5 + $0x2e8] sm:$0xff]
    %v143 = vld [vmem:[#allocation5 + $0x2f0] sm:$0xff]
    %v144 = vld [vmem:[#allocation5 + $0x2f8] sm:$0xff]
    %v145 = vld [vmem:[#allocation5 + $0x300] sm:$0xff]
    %v146 = vld [vmem:[#allocation5 + $0x308] sm:$0xff]
    %v147 = vld [vmem:[#allocation5 + $0x310] sm:$0xff]
    %v148 = vld [vmem:[#allocation5 + $0x318] sm:$0xff]
    %v149 = vld [vmem:[#allocation5 + $0x320] sm:$0xff]
    %v150 = vld [vmem:[#allocation5 + $0x328] sm:$0xff]
    %v151 = vld [vmem:[#allocation5 + $0x330] sm:$0xff]
    %v152 = vld [vmem:[#allocation5 + $0x338] sm:$0xff]
    %v153 = vld [vmem:[#allocation5 + $0x340] sm:$0xff]
    %v154 = vld [vmem:[#allocation5 + $0x348] sm:$0xff]
    %v155 = vld [vmem:[#allocation5 + $0x350] sm:$0xff]
    %v156 = vld [vmem:[#allocation5 + $0x358] sm:$0xff]
    %v157 = vld [vmem:[#allocation5 + $0x360] sm:$0xff]
    %v158 = vld [vmem:[#allocation5 + $0x368] sm:$0xff]
    %v159 = vld [vmem:[#allocation5 + $0x370] sm:$0xff]
    %v160 = vld [vmem:[#allocation5 + $0x378] sm:$0xff]
    %v161 = vld [vmem:[#allocation5 + $0x380] sm:$0xff]
    %v162 = vld [vmem:[#allocation5 + $0x388] sm:$0xff]
    %v163 = vld [vmem:[#allocation5 + $0x390] sm:$0xff]
    %v164 = vld [vmem:[#allocation5 + $0x398] sm:$0xff]
    %v165 = vld [vmem:[#allocation5 + $0x3a0] sm:$0xff]
    %v166 = vld [vmem:[#allocation5 + $0x3a8] sm:$0xff]
    %v167 = vld [vmem:[#allocation5 + $0x3b0] sm:$0xff]
    %v168 = vld [vmem:[#allocation5 + $0x3b8] sm:$0xff]
    %v169 = vld [vmem:[#allocation5 + $0x3c0] sm:$0xff]
    %v170 = vld [vmem:[#allocation5 + $0x3c8] sm:$0xff]
    %v171 = vld [vmem:[#allocation5 + $0x3d0] sm:$0xff]
    %v172 = vld [vmem:[#allocation5 + $0x3d8] sm:$0xff]
    %v173 = vld [vmem:[#allocation5 + $0x3e0] sm:$0xff]
    %v174 = vld [vmem:[#allocation5 + $0x3e8] sm:$0xff]
    %v175 = vld [vmem:[#allocation5 + $0x3f0] sm:$0xff]
    %v176 = vld [vmem:[#allocation5 + $0x3f8] sm:$0xff]
    %v305 = vunpack.c.l.b16 %v49
    %v306 = vunpack.c.h.b16 %v49
    %v307 = vunpack.c.l.b16 %v50
    %v308 = vunpack.c.h.b16 %v50
    %v309 = vunpack.c.l.b16 %v51
    %v310 = vunpack.c.h.b16 %v51
    %v311 = vunpack.c.l.b16 %v52
    %v312 = vunpack.c.h.b16 %v52
    %v313 = vunpack.c.l.b16 %v53
    %v314 = vunpack.c.h.b16 %v53
    %v315 = vunpack.c.l.b16 %v54
    %v316 = vunpack.c.h.b16 %v54
    %v317 = vunpack.c.l.b16 %v55
    %v318 = vunpack.c.h.b16 %v55
    %v319 = vunpack.c.l.b16 %v56
    %v320 = vunpack.c.h.b16 %v56
    %v321 = vunpack.c.l.b16 %v57
    %v322 = vunpack.c.h.b16 %v57
    %v323 = vunpack.c.l.b16 %v58
    %v324 = vunpack.c.h.b16 %v58
    %v325 = vunpack.c.l.b16 %v59
    %v326 = vunpack.c.h.b16 %v59
    %v327 = vunpack.c.l.b16 %v60
    %v328 = vunpack.c.h.b16 %v60
    %v329 = vunpack.c.l.b16 %v61
    %v330 = vunpack.c.h.b16 %v61
    %v331 = vunpack.c.l.b16 %v62
    %v332 = vunpack.c.h.b16 %v62
    %v333 = vunpack.c.l.b16 %v63
    %v334 = vunpack.c.h.b16 %v63
    %v335 = vunpack.c.l.b16 %v64
    %v336 = vunpack.c.h.b16 %v64
    %v337 = vunpack.c.l.b16 %v65
    %v338 = vunpack.c.h.b16 %v65
    %v339 = vunpack.c.l.b16 %v66
    %v340 = vunpack.c.h.b16 %v66
    %v341 = vunpack.c.l.b16 %v67
    %v342 = vunpack.c.h.b16 %v67
    %v343 = vunpack.c.l.b16 %v68
    %v344 = vunpack.c.h.b16 %v68
    %v345 = vunpack.c.l.b16 %v69
    %v346 = vunpack.c.h.b16 %v69
    %v347 = vunpack.c.l.b16 %v70
    %v348 = vunpack.c.h.b16 %v70
    %v349 = vunpack.c.l.b16 %v71
    %v350 = vunpack.c.h.b16 %v71
    %v351 = vunpack.c.l.b16 %v72
    %v352 = vunpack.c.h.b16 %v72
    %v353 = vunpack.c.l.b16 %v73
    %v354 = vunpack.c.h.b16 %v73
    %v355 = vunpack.c.l.b16 %v74
    %v356 = vunpack.c.h.b16 %v74
    %v357 = vunpack.c.l.b16 %v75
    %v358 = vunpack.c.h.b16 %v75
    %v359 = vunpack.c.l.b16 %v76
    %v360 = vunpack.c.h.b16 %v76
    %v361 = vunpack.c.l.b16 %v77
    %v362 = vunpack.c.h.b16 %v77
    %v363 = vunpack.c.l.b16 %v78
    %v364 = vunpack.c.h.b16 %v78
    %v365 = vunpack.c.l.b16 %v79
    %v366 = vunpack.c.h.b16 %v79
    %v367 = vunpack.c.l.b16 %v80
    %v368 = vunpack.c.h.b16 %v80
    %v369 = vunpack.c.l.b16 %v81
    %v370 = vunpack.c.h.b16 %v81
    %v371 = vunpack.c.l.b16 %v82
    %v372 = vunpack.c.h.b16 %v82
    %v373 = vunpack.c.l.b16 %v83
    %v374 = vunpack.c.h.b16 %v83
    %v375 = vunpack.c.l.b16 %v84
    %v376 = vunpack.c.h.b16 %v84
    %v377 = vunpack.c.l.b16 %v85
    %v378 = vunpack.c.h.b16 %v85
    %v379 = vunpack.c.l.b16 %v86
    %v380 = vunpack.c.h.b16 %v86
    %v381 = vunpack.c.l.b16 %v87
    %v382 = vunpack.c.h.b16 %v87
    %v383 = vunpack.c.l.b16 %v88
    %v384 = vunpack.c.h.b16 %v88
    %v385 = vunpack.c.l.b16 %v89
    %v386 = vunpack.c.h.b16 %v89
    %v387 = vunpack.c.l.b16 %v90
    %v388 = vunpack.c.h.b16 %v90
    %v389 = vunpack.c.l.b16 %v91
    %v390 = vunpack.c.h.b16 %v91
    %v391 = vunpack.c.l.b16 %v92
    %v392 = vunpack.c.h.b16 %v92
    %v393 = vunpack.c.l.b16 %v93
    %v394 = vunpack.c.h.b16 %v93
    %v395 = vunpack.c.l.b16 %v94
    %v396 = vunpack.c.h.b16 %v94
    %v397 = vunpack.c.l.b16 %v95
    %v398 = vunpack.c.h.b16 %v95
    %v399 = vunpack.c.l.b16 %v96
    %v400 = vunpack.c.h.b16 %v96
    %v401 = vunpack.c.l.b16 %v97
    %v402 = vunpack.c.h.b16 %v97
    %v403 = vunpack.c.l.b16 %v98
    %v404 = vunpack.c.h.b16 %v98
    %v405 = vunpack.c.l.b16 %v99
    %v406 = vunpack.c.h.b16 %v99
    %v407 = vunpack.c.l.b16 %v100
    %v408 = vunpack.c.h.b16 %v100
    %v409 = vunpack.c.l.b16 %v101
    %v410 = vunpack.c.h.b16 %v101
    %v411 = vunpack.c.l.b16 %v102
    %v412 = vunpack.c.h.b16 %v102
    %v413 = vunpack.c.l.b16 %v103
    %v414 = vunpack.c.h.b16 %v103
    %v415 = vunpack.c.l.b16 %v104
    %v416 = vunpack.c.h.b16 %v104
    %v417 = vunpack.c.l.b16 %v105
    %v418 = vunpack.c.h.b16 %v105
    %v419 = vunpack.c.l.b16 %v106
    %v420 = vunpack.c.h.b16 %v106
    %v421 = vunpack.c.l.b16 %v107
    %v422 = vunpack.c.h.b16 %v107
    %v423 = vunpack.c.l.b16 %v108
    %v424 = vunpack.c.h.b16 %v108
    %v425 = vunpack.c.l.b16 %v109
    %v426 = vunpack.c.h.b16 %v109
    %v427 = vunpack.c.l.b16 %v110
    %v428 = vunpack.c.h.b16 %v110
    %v429 = vunpack.c.l.b16 %v111
    %v430 = vunpack.c.h.b16 %v111
    %v431 = vunpack.c.l.b16 %v112
    %v432 = vunpack.c.h.b16 %v112
    %v433 = vunpack.c.l.b16 %v113
    %v434 = vunpack.c.h.b16 %v113
    %v435 = vunpack.c.l.b16 %v114
    %v436 = vunpack.c.h.b16 %v114
    %v437 = vunpack.c.l.b16 %v115
    %v438 = vunpack.c.h.b16 %v115
    %v439 = vunpack.c.l.b16 %v116
    %v440 = vunpack.c.h.b16 %v116
    %v441 = vunpack.c.l.b16 %v117
    %v442 = vunpack.c.h.b16 %v117
    %v443 = vunpack.c.l.b16 %v118
    %v444 = vunpack.c.h.b16 %v118
    %v445 = vunpack.c.l.b16 %v119
    %v446 = vunpack.c.h.b16 %v119
    %v447 = vunpack.c.l.b16 %v120
    %v448 = vunpack.c.h.b16 %v120
    %v449 = vunpack.c.l.b16 %v121
    %v450 = vunpack.c.h.b16 %v121
    %v451 = vunpack.c.l.b16 %v122
    %v452 = vunpack.c.h.b16 %v122
    %v453 = vunpack.c.l.b16 %v123
    %v454 = vunpack.c.h.b16 %v123
    %v455 = vunpack.c.l.b16 %v124
    %v456 = vunpack.c.h.b16 %v124
    %v457 = vunpack.c.l.b16 %v125
    %v458 = vunpack.c.h.b16 %v125
    %v459 = vunpack.c.l.b16 %v126
    %v460 = vunpack.c.h.b16 %v126
    %v461 = vunpack.c.l.b16 %v127
    %v462 = vunpack.c.h.b16 %v127
    %v463 = vunpack.c.l.b16 %v128
    %v464 = vunpack.c.h.b16 %v128
    %v465 = vunpack.c.l.b16 %v129
    %v466 = vunpack.c.h.b16 %v129
    %v467 = vunpack.c.l.b16 %v130
    %v468 = vunpack.c.h.b16 %v130
    %v469 = vunpack.c.l.b16 %v131
    %v470 = vunpack.c.h.b16 %v131
    %v471 = vunpack.c.l.b16 %v132
    %v472 = vunpack.c.h.b16 %v132
    %v473 = vunpack.c.l.b16 %v133
    %v474 = vunpack.c.h.b16 %v133
    %v475 = vunpack.c.l.b16 %v134
    %v476 = vunpack.c.h.b16 %v134
    %v477 = vunpack.c.l.b16 %v135
    %v478 = vunpack.c.h.b16 %v135
    %v479 = vunpack.c.l.b16 %v136
    %v480 = vunpack.c.h.b16 %v136
    %v481 = vunpack.c.l.b16 %v137
    %v482 = vunpack.c.h.b16 %v137
    %v483 = vunpack.c.l.b16 %v138
    %v484 = vunpack.c.h.b16 %v138
    %v485 = vunpack.c.l.b16 %v139
    %v486 = vunpack.c.h.b16 %v139
    %v487 = vunpack.c.l.b16 %v140
    %v488 = vunpack.c.h.b16 %v140
    %v489 = vunpack.c.l.b16 %v141
    %v490 = vunpack.c.h.b16 %v141
    %v491 = vunpack.c.l.b16 %v142
    %v492 = vunpack.c.h.b16 %v142
    %v493 = vunpack.c.l.b16 %v143
    %v494 = vunpack.c.h.b16 %v143
    %v495 = vunpack.c.l.b16 %v144
    %v496 = vunpack.c.h.b16 %v144
    %v497 = vunpack.c.l.b16 %v145
    %v498 = vunpack.c.h.b16 %v145
    %v499 = vunpack.c.l.b16 %v146
    %v500 = vunpack.c.h.b16 %v146
    %v501 = vunpack.c.l.b16 %v147
    %v502 = vunpack.c.h.b16 %v147
    %v503 = vunpack.c.l.b16 %v148
    %v504 = vunpack.c.h.b16 %v148
    %v505 = vunpack.c.l.b16 %v149
    %v506 = vunpack.c.h.b16 %v149
    %v507 = vunpack.c.l.b16 %v150
    %v508 = vunpack.c.h.b16 %v150
    %v509 = vunpack.c.l.b16 %v151
    %v510 = vunpack.c.h.b16 %v151
    %v511 = vunpack.c.l.b16 %v152
    %v512 = vunpack.c.h.b16 %v152
    %v513 = vunpack.c.l.b16 %v153
    %v514 = vunpack.c.h.b16 %v153
    %v515 = vunpack.c.l.b16 %v154
    %v516 = vunpack.c.h.b16 %v154
    %v517 = vunpack.c.l.b16 %v155
    %v518 = vunpack.c.h.b16 %v155
    %v519 = vunpack.c.l.b16 %v156
    %v520 = vunpack.c.h.b16 %v156
    %v521 = vunpack.c.l.b16 %v157
    %v522 = vunpack.c.h.b16 %v157
    %v523 = vunpack.c.l.b16 %v158
    %v524 = vunpack.c.h.b16 %v158
    %v525 = vunpack.c.l.b16 %v159
    %v526 = vunpack.c.h.b16 %v159
    %v527 = vunpack.c.l.b16 %v160
    %v528 = vunpack.c.h.b16 %v160
    %v529 = vunpack.c.l.b16 %v161
    %v530 = vunpack.c.h.b16 %v161
    %v531 = vunpack.c.l.b16 %v162
    %v532 = vunpack.c.h.b16 %v162
    %v533 = vunpack.c.l.b16 %v163
    %v534 = vunpack.c.h.b16 %v163
    %v535 = vunpack.c.l.b16 %v164
    %v536 = vunpack.c.h.b16 %v164
    %v537 = vunpack.c.l.b16 %v165
    %v538 = vunpack.c.h.b16 %v165
    %v539 = vunpack.c.l.b16 %v166
    %v540 = vunpack.c.h.b16 %v166
    %v541 = vunpack.c.l.b16 %v167
    %v542 = vunpack.c.h.b16 %v167
    %v543 = vunpack.c.l.b16 %v168
    %v544 = vunpack.c.h.b16 %v168
    %v545 = vunpack.c.l.b16 %v169
    %v546 = vunpack.c.h.b16 %v169
    %v547 = vunpack.c.l.b16 %v170
    %v548 = vunpack.c.h.b16 %v170
    %v549 = vunpack.c.l.b16 %v171
    %v550 = vunpack.c.h.b16 %v171
    %v551 = vunpack.c.l.b16 %v172
    %v552 = vunpack.c.h.b16 %v172
    %v553 = vunpack.c.l.b16 %v173
    %v554 = vunpack.c.h.b16 %v173
    %v555 = vunpack.c.l.b16 %v174
    %v556 = vunpack.c.h.b16 %v174
    %v557 = vunpack.c.l.b16 %v175
    %v558 = vunpack.c.h.b16 %v175
    %v559 = vunpack.c.l.b16 %v176
    %v560 = vunpack.c.h.b16 %v176
    %v561 = vpack.c.b16 %v309, %v305
    %v562 = vpack.c.b16 %v310, %v306
    %v563 = vpack.c.b16 %v311, %v307
    %v564 = vpack.c.b16 %v312, %v308
    %v565 = vpack.c.b16 %v317, %v313
    %v566 = vpack.c.b16 %v318, %v314
    %v567 = vpack.c.b16 %v319, %v315
    %v568 = vpack.c.b16 %v320, %v316
    %v569 = vpack.c.b16 %v325, %v321
    %v570 = vpack.c.b16 %v326, %v322
    %v571 = vpack.c.b16 %v327, %v323
    %v572 = vpack.c.b16 %v328, %v324
    %v573 = vpack.c.b16 %v333, %v329
    %v574 = vpack.c.b16 %v334, %v330
    %v575 = vpack.c.b16 %v335, %v331
    %v576 = vpack.c.b16 %v336, %v332
    %v577 = vpack.c.b16 %v341, %v337
    %v578 = vpack.c.b16 %v342, %v338
    %v579 = vpack.c.b16 %v343, %v339
    %v580 = vpack.c.b16 %v344, %v340
    %v581 = vpack.c.b16 %v349, %v345
    %v582 = vpack.c.b16 %v350, %v346
    %v583 = vpack.c.b16 %v351, %v347
    %v584 = vpack.c.b16 %v352, %v348
    %v585 = vpack.c.b16 %v357, %v353
    %v586 = vpack.c.b16 %v358, %v354
    %v587 = vpack.c.b16 %v359, %v355
    %v588 = vpack.c.b16 %v360, %v356
    %v589 = vpack.c.b16 %v365, %v361
    %v590 = vpack.c.b16 %v366, %v362
    %v591 = vpack.c.b16 %v367, %v363
    %v592 = vpack.c.b16 %v368, %v364
    %v593 = vpack.c.b16 %v373, %v369
    %v594 = vpack.c.b16 %v374, %v370
    %v595 = vpack.c.b16 %v375, %v371
    %v596 = vpack.c.b16 %v376, %v372
    %v597 = vpack.c.b16 %v381, %v377
    %v598 = vpack.c.b16 %v382, %v378
    %v599 = vpack.c.b16 %v383, %v379
    %v600 = vpack.c.b16 %v384, %v380
    %v601 = vpack.c.b16 %v389, %v385
    %v602 = vpack.c.b16 %v390, %v386
    %v603 = vpack.c.b16 %v391, %v387
    %v604 = vpack.c.b16 %v392, %v388
    %v605 = vpack.c.b16 %v397, %v393
    %v606 = vpack.c.b16 %v398, %v394
    %v607 = vpack.c.b16 %v399, %v395
    %v608 = vpack.c.b16 %v400, %v396
    %v609 = vpack.c.b16 %v405, %v401
    %v610 = vpack.c.b16 %v406, %v402
    %v611 = vpack.c.b16 %v407, %v403
    %v612 = vpack.c.b16 %v408, %v404
    %v613 = vpack.c.b16 %v413, %v409
    %v614 = vpack.c.b16 %v414, %v410
    %v615 = vpack.c.b16 %v415, %v411
    %v616 = vpack.c.b16 %v416, %v412
    %v617 = vpack.c.b16 %v421, %v417
    %v618 = vpack.c.b16 %v422, %v418
    %v619 = vpack.c.b16 %v423, %v419
    %v620 = vpack.c.b16 %v424, %v420
    %v621 = vpack.c.b16 %v429, %v425
    %v622 = vpack.c.b16 %v430, %v426
    %v623 = vpack.c.b16 %v431, %v427
    %v624 = vpack.c.b16 %v432, %v428
    %v625 = vpack.c.b16 %v437, %v433
    %v626 = vpack.c.b16 %v438, %v434
    %v627 = vpack.c.b16 %v439, %v435
    %v628 = vpack.c.b16 %v440, %v436
    %v629 = vpack.c.b16 %v445, %v441
    %v630 = vpack.c.b16 %v446, %v442
    %v631 = vpack.c.b16 %v447, %v443
    %v632 = vpack.c.b16 %v448, %v444
    %v633 = vpack.c.b16 %v453, %v449
    %v634 = vpack.c.b16 %v454, %v450
    %v635 = vpack.c.b16 %v455, %v451
    %v636 = vpack.c.b16 %v456, %v452
    %v637 = vpack.c.b16 %v461, %v457
    %v638 = vpack.c.b16 %v462, %v458
    %v639 = vpack.c.b16 %v463, %v459
    %v640 = vpack.c.b16 %v464, %v460
    %v641 = vpack.c.b16 %v469, %v465
    %v642 = vpack.c.b16 %v470, %v466
    %v643 = vpack.c.b16 %v471, %v467
    %v644 = vpack.c.b16 %v472, %v468
    %v645 = vpack.c.b16 %v477, %v473
    %v646 = vpack.c.b16 %v478, %v474
    %v647 = vpack.c.b16 %v479, %v475
    %v648 = vpack.c.b16 %v480, %v476
    %v649 = vpack.c.b16 %v485, %v481
    %v650 = vpack.c.b16 %v486, %v482
    %v651 = vpack.c.b16 %v487, %v483
    %v652 = vpack.c.b16 %v488, %v484
    %v653 = vpack.c.b16 %v493, %v489
    %v654 = vpack.c.b16 %v494, %v490
    %v655 = vpack.c.b16 %v495, %v491
    %v656 = vpack.c.b16 %v496, %v492
    %v657 = vpack.c.b16 %v501, %v497
    %v658 = vpack.c.b16 %v502, %v498
    %v659 = vpack.c.b16 %v503, %v499
    %v660 = vpack.c.b16 %v504, %v500
    %v661 = vpack.c.b16 %v509, %v505
    %v662 = vpack.c.b16 %v510, %v506
    %v663 = vpack.c.b16 %v511, %v507
    %v664 = vpack.c.b16 %v512, %v508
    %v665 = vpack.c.b16 %v517, %v513
    %v666 = vpack.c.b16 %v518, %v514
    %v667 = vpack.c.b16 %v519, %v515
    %v668 = vpack.c.b16 %v520, %v516
    %v669 = vpack.c.b16 %v525, %v521
    %v670 = vpack.c.b16 %v526, %v522
    %v671 = vpack.c.b16 %v527, %v523
    %v672 = vpack.c.b16 %v528, %v524
    %v673 = vpack.c.b16 %v533, %v529
    %v674 = vpack.c.b16 %v534, %v530
    %v675 = vpack.c.b16 %v535, %v531
    %v676 = vpack.c.b16 %v536, %v532
    %v677 = vpack.c.b16 %v541, %v537
    %v678 = vpack.c.b16 %v542, %v538
    %v679 = vpack.c.b16 %v543, %v539
    %v680 = vpack.c.b16 %v544, %v540
    %v681 = vpack.c.b16 %v549, %v545
    %v682 = vpack.c.b16 %v550, %v546
    %v683 = vpack.c.b16 %v551, %v547
    %v684 = vpack.c.b16 %v552, %v548
    %v685 = vpack.c.b16 %v557, %v553
    %v686 = vpack.c.b16 %v558, %v554
    %v687 = vpack.c.b16 %v559, %v555
    %v688 = vpack.c.b16 %v560, %v556
    %817 = vmatprep.subr.bf16.mxu0 %v590
    %818 = vmatpush1.bf16.msra.mxu0 %v589
    %819 = vmatprep.subr.bf16.mxu0 %v586
    %820 = vmatpush1.bf16.msra.mxu0 %v585
    %821 = vmatprep.subr.bf16.mxu0 %v582
    %822 = vmatpush1.bf16.msra.mxu0 %v581
    %823 = vmatprep.subr.bf16.mxu0 %v578
    %824 = vmatpush1.bf16.msra.mxu0 %v577
    %825 = vmatprep.subr.bf16.mxu0 %v574
    %826 = vmatpush1.bf16.msra.mxu0 %v573
    %827 = vmatprep.subr.bf16.mxu0 %v570
    %828 = vmatpush1.bf16.msra.mxu0 %v569
    %829 = vmatprep.subr.bf16.mxu0 %v566
    %830 = vmatpush1.bf16.msra.mxu0 %v565
    %831 = vmatprep.subr.bf16.mxu0 %v562
    %832 = vmatpush1.bf16.msra.mxu0 %v561
    %833 = vmatprep.subr.bf16.mxu0 %v622
    %834 = vmatpush2.bf16.msra.mxu0 %v621
    %835 = vmatprep.subr.bf16.mxu0 %v618
    %836 = vmatpush2.bf16.msra.mxu0 %v617
    %837 = vmatprep.subr.bf16.mxu0 %v614
    %838 = vmatpush2.bf16.msra.mxu0 %v613
    %839 = vmatprep.subr.bf16.mxu0 %v610
    %840 = vmatpush2.bf16.msra.mxu0 %v609
    %841 = vmatprep.subr.bf16.mxu0 %v606
    %842 = vmatpush2.bf16.msra.mxu0 %v605
    %843 = vmatprep.subr.bf16.mxu0 %v602
    %844 = vmatpush2.bf16.msra.mxu0 %v601
    %845 = vmatprep.subr.bf16.mxu0 %v598
    %846 = vmatpush2.bf16.msra.mxu0 %v597
    %847 = vmatprep.subr.bf16.mxu0 %v594
    %848 = vmatpush2.bf16.msra.mxu0 %v593
    %849 = vmatprep.mubr.bf16.mxu0 %v46
    %850 = vmatmul.mubr.bf16.gmra.mxu0 %v45
    %v851 = vpop.f32.mrf.mxu0
    %v852 = vadd.f32 0.0, %v851
    %v853 = vpop.f32.mrf.mxu0
    %v854 = vadd.f32 0.0, %v853
    %v855 = vpop.f32.mrf.mxu0
    %v856 = vpop.f32.mrf.mxu0
    %857 = vdwg.mxu0
    %858 = vmatprep.subr.bf16.mxu0 %v654
    %859 = vmatpush1.bf16.msra.mxu0 %v653
    %860 = vmatprep.subr.bf16.mxu0 %v650
    %861 = vmatpush1.bf16.msra.mxu0 %v649
    %862 = vmatprep.subr.bf16.mxu0 %v646
    %863 = vmatpush1.bf16.msra.mxu0 %v645
    %864 = vmatprep.subr.bf16.mxu0 %v642
    %865 = vmatpush1.bf16.msra.mxu0 %v641
    %866 = vmatprep.subr.bf16.mxu0 %v638
    %867 = vmatpush1.bf16.msra.mxu0 %v637
    %868 = vmatprep.subr.bf16.mxu0 %v634
    %869 = vmatpush1.bf16.msra.mxu0 %v633
    %870 = vmatprep.subr.bf16.mxu0 %v630
    %871 = vmatpush1.bf16.msra.mxu0 %v629
    %872 = vmatprep.subr.bf16.mxu0 %v626
    %873 = vmatpush1.bf16.msra.mxu0 %v625
    %874 = vmatprep.subr.bf16.mxu0 %v686
    %875 = vmatpush2.bf16.msra.mxu0 %v685
    %876 = vmatprep.subr.bf16.mxu0 %v682
    %877 = vmatpush2.bf16.msra.mxu0 %v681
    %878 = vmatprep.subr.bf16.mxu0 %v678
    %879 = vmatpush2.bf16.msra.mxu0 %v677
    %880 = vmatprep.subr.bf16.mxu0 %v674
    %881 = vmatpush2.bf16.msra.mxu0 %v673
    %882 = vmatprep.subr.bf16.mxu0 %v670
    %883 = vmatpush2.bf16.msra.mxu0 %v669
    %884 = vmatprep.subr.bf16.mxu0 %v666
    %885 = vmatpush2.bf16.msra.mxu0 %v665
    %886 = vmatprep.subr.bf16.mxu0 %v662
    %887 = vmatpush2.bf16.msra.mxu0 %v661
    %888 = vmatprep.subr.bf16.mxu0 %v658
    %889 = vmatpush2.bf16.msra.mxu0 %v657
    %890 = vmatprep.mubr.bf16.mxu0 %v48
    %891 = vmatmul.mubr.bf16.gmra.mxu0 %v47
    %v892 = vpop.f32.mrf.mxu0
    %v893 = vadd.f32 %v852, %v892
    %v894 = vpop.f32.mrf.mxu0
    %v895 = vadd.f32 %v854, %v894
    %v896 = vpop.f32.mrf.mxu0
    %v897 = vpop.f32.mrf.mxu0
    %898 = vdwg.mxu0
    %899 = vmatprep.subr.bf16.mxu0 %v592
    %900 = vmatpush1.bf16.msra.mxu0 %v591
    %901 = vmatprep.subr.bf16.mxu0 %v588
    %902 = vmatpush1.bf16.msra.mxu0 %v587
    %903 = vmatprep.subr.bf16.mxu0 %v584
    %904 = vmatpush1.bf16.msra.mxu0 %v583
    %905 = vmatprep.subr.bf16.mxu0 %v580
    %906 = vmatpush1.bf16.msra.mxu0 %v579
    %907 = vmatprep.subr.bf16.mxu0 %v576
    %908 = vmatpush1.bf16.msra.mxu0 %v575
    %909 = vmatprep.subr.bf16.mxu0 %v572
    %910 = vmatpush1.bf16.msra.mxu0 %v571
    %911 = vmatprep.subr.bf16.mxu0 %v568
    %912 = vmatpush1.bf16.msra.mxu0 %v567
    %913 = vmatprep.subr.bf16.mxu0 %v564
    %914 = vmatpush1.bf16.msra.mxu0 %v563
    %915 = vmatprep.subr.bf16.mxu0 %v624
    %916 = vmatpush2.bf16.msra.mxu0 %v623
    %917 = vmatprep.subr.bf16.mxu0 %v620
    %918 = vmatpush2.bf16.msra.mxu0 %v619
    %919 = vmatprep.subr.bf16.mxu0 %v616
    %920 = vmatpush2.bf16.msra.mxu0 %v615
    %921 = vmatprep.subr.bf16.mxu0 %v612
    %922 = vmatpush2.bf16.msra.mxu0 %v611
    %923 = vmatprep.subr.bf16.mxu0 %v608
    %924 = vmatpush2.bf16.msra.mxu0 %v607
    %925 = vmatprep.subr.bf16.mxu0 %v604
    %926 = vmatpush2.bf16.msra.mxu0 %v603
    %927 = vmatprep.subr.bf16.mxu0 %v600
    %928 = vmatpush2.bf16.msra.mxu0 %v599
    %929 = vmatprep.subr.bf16.mxu0 %v596
    %930 = vmatpush2.bf16.msra.mxu0 %v595
    %931 = vmatprep.mubr.bf16.mxu0 %v46
    %932 = vmatmul.mubr.bf16.gmra.mxu0 %v45
    %v933 = vpop.f32.mrf.mxu0
    %v934 = vadd.f32 0.0, %v933
    %v935 = vpop.f32.mrf.mxu0
    %v936 = vadd.f32 0.0, %v935
    %v937 = vpop.f32.mrf.mxu0
    %v938 = vpop.f32.mrf.mxu0
    %939 = vdwg.mxu0
    %940 = vmatprep.subr.bf16.mxu0 %v656
    %941 = vmatpush1.bf16.msra.mxu0 %v655
    %942 = vmatprep.subr.bf16.mxu0 %v652
    %943 = vmatpush1.bf16.msra.mxu0 %v651
    %944 = vmatprep.subr.bf16.mxu0 %v648
    %945 = vmatpush1.bf16.msra.mxu0 %v647
    %946 = vmatprep.subr.bf16.mxu0 %v644
    %947 = vmatpush1.bf16.msra.mxu0 %v643
    %948 = vmatprep.subr.bf16.mxu0 %v640
    %949 = vmatpush1.bf16.msra.mxu0 %v639
    %950 = vmatprep.subr.bf16.mxu0 %v636
    %951 = vmatpush1.bf16.msra.mxu0 %v635
    %952 = vmatprep.subr.bf16.mxu0 %v632
    %953 = vmatpush1.bf16.msra.mxu0 %v631
    %954 = vmatprep.subr.bf16.mxu0 %v628
    %955 = vmatpush1.bf16.msra.mxu0 %v627
    %956 = vmatprep.subr.bf16.mxu0 %v688
    %957 = vmatpush2.bf16.msra.mxu0 %v687
    %958 = vmatprep.subr.bf16.mxu0 %v684
    %959 = vmatpush2.bf16.msra.mxu0 %v683
    %960 = vmatprep.subr.bf16.mxu0 %v680
    %961 = vmatpush2.bf16.msra.mxu0 %v679
    %962 = vmatprep.subr.bf16.mxu0 %v676
    %963 = vmatpush2.bf16.msra.mxu0 %v675
    %964 = vmatprep.subr.bf16.mxu0 %v672
    %965 = vmatpush2.bf16.msra.mxu0 %v671
    %966 = vmatprep.subr.bf16.mxu0 %v668
    %967 = vmatpush2.bf16.msra.mxu0 %v667
    %968 = vmatprep.subr.bf16.mxu0 %v664
    %969 = vmatpush2.bf16.msra.mxu0 %v663
    %970 = vmatprep.subr.bf16.mxu0 %v660
    %971 = vmatpush2.bf16.msra.mxu0 %v659
    %972 = vmatprep.mubr.bf16.mxu0 %v48
    %973 = vmatmul.mubr.bf16.gmra.mxu0 %v47
    %v974 = vpop.f32.mrf.mxu0
    %v975 = vadd.f32 %v934, %v974
    %v976 = vpop.f32.mrf.mxu0
    %v977 = vadd.f32 %v936, %v976
    %v978 = vpop.f32.mrf.mxu0
    %v979 = vpop.f32.mrf.mxu0
    %980 = vdwg.mxu0
    %v981 = vrot.slane %v893, 4
    %v982 = vadd.f32 %v893, %v981
    %v983 = vrot.slane %v982, 2
    %v984 = vadd.f32 %v982, %v983
    %v985 = vrot.slane %v984, 1
    %v986 = vadd.f32 %v984, %v985
    %v987 = vrot.slane %v895, 4
    %v988 = vadd.f32 %v895, %v987
    %v989 = vrot.slane %v988, 2
    %v990 = vadd.f32 %v988, %v989
    %v991 = vrot.slane %v990, 1
    %v992 = vadd.f32 %v990, %v991
    %v993 = vrot.slane %v975, 4
    %v994 = vadd.f32 %v975, %v993
    %v995 = vrot.slane %v994, 2
    %v996 = vadd.f32 %v994, %v995
    %v997 = vrot.slane %v996, 1
    %v998 = vadd.f32 %v996, %v997
    %v999 = vrot.slane %v977, 4
    %v1000 = vadd.f32 %v977, %v999
    %v1001 = vrot.slane %v1000, 2
    %v1002 = vadd.f32 %v1000, %v1001
    %v1003 = vrot.slane %v1002, 1
    %v1004 = vadd.f32 %v1002, %v1003
    %v1005 = vmul.f32 %v893, %v893
    %v1006 = vmul.f32 %v895, %v895
    %v1007 = vmul.f32 %v975, %v975
    %v1008 = vmul.f32 %v977, %v977
    %v1009 = vrot.slane %v1005, 4
    %v1010 = vadd.f32 %v1005, %v1009
    %v1011 = vrot.slane %v1010, 2
    %v1012 = vadd.f32 %v1010, %v1011
    %v1013 = vrot.slane %v1012, 1
    %v1014 = vadd.f32 %v1012, %v1013
    %v1015 = vrot.slane %v1006, 4
    %v1016 = vadd.f32 %v1006, %v1015
    %v1017 = vrot.slane %v1016, 2
    %v1018 = vadd.f32 %v1016, %v1017
    %v1019 = vrot.slane %v1018, 1
    %v1020 = vadd.f32 %v1018, %v1019
    %v1021 = vrot.slane %v1007, 4
    %v1022 = vadd.f32 %v1007, %v1021
    %v1023 = vrot.slane %v1022, 2
    %v1024 = vadd.f32 %v1022, %v1023
    %v1025 = vrot.slane %v1024, 1
    %v1026 = vadd.f32 %v1024, %v1025
    %v1027 = vrot.slane %v1008, 4
    %v1028 = vadd.f32 %v1008, %v1027
    %v1029 = vrot.slane %v1028, 2
    %v1030 = vadd.f32 %v1028, %v1029
    %v1031 = vrot.slane %v1030, 1
    %v1032 = vadd.f32 %v1030, %v1031
    %vm1033 = vcmask 1040384
    %v1034 = vsel %vm1033, %v986, %v1014
    %v1035 = vsel %vm1033, %v992, %v1020
    %v1036 = vsel %vm1033, %v998, %v1026
    %v1037 = vsel %vm1033, %v1004, %v1032
    %vm1038 = vcmask 1041408
    %v1039 = vsel %vm1038, %v1034, 0.0
    %v1040 = vsel %vm1038, %v1035, 0.0
    %v1041 = vsel %vm1038, %v1036, 0.0
    %v1042 = vsel %vm1038, %v1037, 0.0
    %1043 = vst [vmem:[#allocation8] sm:$0xff] %v1039
    %1044 = vst [vmem:[#allocation8 + $0x8] sm:$0xff] %v1040
    %1045 = vst [vmem:[#allocation8 + $0x10] sm:$0xff] %v1041
    %1046 = vst [vmem:[#allocation8 + $0x18] sm:$0xff] %v1042
    %v1047 = vpack.c.bf16 %v893, %v893
    %v1048 = vpack.c.bf16 %v895, %v895
    %v1049 = vpack.c.bf16 %v975, %v975
    %v1050 = vpack.c.bf16 %v977, %v977
    %v1055 = vunpack.c.l.b16 %v1047
    %v1056 = vunpack.c.l.b16 %v1048
    %v1057 = vunpack.c.l.b16 %v1049
    %v1058 = vunpack.c.l.b16 %v1050
    %v1059 = vpack.c.b16 %v1056, %v1055
    %v1060 = vpack.c.b16 %v1058, %v1057
    %1063 = vst [vmem:[#allocation7] sm:$0xff] %v1059
    %1064 = vst [vmem:[#allocation7 + $0x8] sm:$0xff] %v1060
    // Predicated region
    $region18: #{tpu_custom_call.1} parent=1 // pred_check
      _
    $region19: #{tpu_custom_call.1} parent=1 // pred_check_branch
      %1066 = sbr.rel (0) target = $region21
    $region20: #{tpu_custom_call.1} parent=1 // pred_region
      %s1068 = ssub.s32 256, 256
      %1069 = vsyncadd [#allocation4], %s1068
      %s1071 = sshll.u32 [#allocation7], 4
      %s1072 = int_to_ptr.vmem [resolvable:$true] %s1071
      %1074 = dma.vmem_to_hbm [thread:$0]  %s1072, 256, %s2, [#allocation4]
    $region21: #{tpu_custom_call.1} parent=1 // pred_fallthru
      _
    // Predicated region
    $region22: #{tpu_custom_call.1} parent=1 // pred_check
      _
    $region23: #{tpu_custom_call.1} parent=1 // pred_check_branch
      %1076 = sbr.rel (0) target = $region25
    $region24: #{tpu_custom_call.1} parent=1 // pred_region
      %s1078 = ssub.s32 512, 512
      %1079 = vsyncadd [#allocation9], %s1078
      %s1081 = sshll.u32 [#allocation8], 4
      %s1082 = int_to_ptr.vmem [resolvable:$true] %s1081
      %1084 = dma.vmem_to_hbm [thread:$0]  %s1082, 512, %s3, [#allocation9]
    $region25: #{tpu_custom_call.1} parent=1 // pred_fallthru
      _
    // Predicated region
    $region26: #{tpu_custom_call.1} parent=1 // pred_check
      _
    $region27: #{tpu_custom_call.1} parent=1 // pred_check_branch
      %1086 = sbr.rel (0) target = $region29
    $region28: #{tpu_custom_call.1} parent=1 // pred_region
      %1087 = dma.done [#allocation4], 256
    $region29: #{tpu_custom_call.1} parent=1 // pred_fallthru
      _
    // Predicated region
    $region30: #{tpu_custom_call.1} parent=1 // pred_check
      _
    $region31: #{tpu_custom_call.1} parent=1 // pred_check_branch
      %1089 = sbr.rel (0) target = $region33
    $region32: #{tpu_custom_call.1} parent=1 // pred_region
      %1090 = dma.done [#allocation9], 512
    $region33: #{tpu_custom_call.1} parent=1 // pred_fallthru
      _
    %1091 = vsyncpa [#allocation3], 1
    %1092 = vsyncpa [#allocation6], 1
    %1093 = vsyncpa [#allocation4], 1
    %1094 = vsyncpa [#allocation9], 1

</llo_original>
